<compile_context>
chip_gen: v7x
topology: tpu7x:2x2x1
jax: 0.10.0
libtpu: 0.0.40
codegen_flags: <defaults>
</compile_context>

<pallas_src>
import jax
import jax.numpy as jnp
from jax.experimental import pallas as pl
from jax.experimental.pallas import tpu as pltpu

IN_F = 2
HID_F = 4
OUT_F = 1


def fusion_mlp_kernel(x_ref, w1_ref, b1_ref, w2_ref, b2_ref, o_ref):
    """Fused MLP on one sublane+lane dense batch tile.

    x_ref : (2, TS, 128) VMEM  -- features on the leading axis, batch dense
    w1_ref: (2, 4)       SMEM  -- scalar parameters (resident across the grid)
    b1_ref: (1, 4)       SMEM
    w2_ref: (4, 1)       SMEM
    b2_ref: (1, 1)       SMEM
    o_ref : (TS, 128)    VMEM  -- lane/sublane dense output (unmasked stores)
    """
    x0 = x_ref[0]  # (TS, 128)
    x1 = x_ref[1]  # (TS, 128)

    # Unrolled VPU broadcast-FMA: y = W2^T @ relu(W1^T @ x + b1) + b2 (no MXU).
    acc = jnp.zeros_like(x0) + b2_ref[0, 0]
    for j in range(HID_F):
        h_j = jnp.maximum(
            w1_ref[0, j] * x0 + w1_ref[1, j] * x1 + b1_ref[0, j], 0.0
        )
        acc = acc + w2_ref[j, 0] * h_j

    # Sigmoid: exp on the EUP slot; approx reciprocal keeps the divide off the
    # VALU so the kernel stays memory-bound even at v7x bandwidth.
    o_ref[...] = pl.reciprocal(1.0 + jnp.exp(-acc), approx=True)


def fusion_mlp(x, w1, b1, w2, b2, *, tile_rows=2048):
    """x: (N, 2) -> (N, 1). Weights stored (F_in, F_out) (PyTorch W.T)."""
    n = x.shape[0]

    # Defensive parameter shaping (PyTorch nn.Linear biases are 1-D).
    w1 = jnp.asarray(w1, jnp.float32).reshape(IN_F, HID_F)
    b1 = jnp.asarray(b1, jnp.float32).reshape(1, HID_F)
    w2 = jnp.asarray(w2, jnp.float32).reshape(HID_F, OUT_F)
    b2 = jnp.asarray(b2, jnp.float32).reshape(1, OUT_F)

    # Feature-major view of the input: one fused transpose(+pad) pass in XLA,
    # then a free reshape to (2, n_rows, 128) for dense sublane/lane tiles.
    lane, sub = 128, 8
    n_pad = pl.cdiv(n, lane * sub) * (lane * sub)   # pad batch to 1024 only
    xt = jnp.transpose(x.astype(jnp.float32))       # (2, N)
    if n_pad != n:
        xt = jnp.pad(xt, ((0, 0), (0, n_pad - n)))
    n_rows = n_pad // lane
    xt = xt.reshape(IN_F, n_rows, lane)             # free row-major view

    ts = min(tile_rows, n_rows)                     # rows per grid step (mult of 8)
    grid = (pl.cdiv(n_rows, ts),)                   # partial tail block allowed

    out = pl.pallas_call(
        fusion_mlp_kernel,
        out_shape=jax.ShapeDtypeStruct((n_rows, lane), jnp.float32),
        grid=grid,
        in_specs=[
            pl.BlockSpec((IN_F, ts, lane), lambda i: (0, i, 0)),
            pl.BlockSpec(memory_space=pltpu.MemorySpace.SMEM),
            pl.BlockSpec(memory_space=pltpu.MemorySpace.SMEM),
            pl.BlockSpec(memory_space=pltpu.MemorySpace.SMEM),
            pl.BlockSpec(memory_space=pltpu.MemorySpace.SMEM),
        ],
        out_specs=pl.BlockSpec((ts, lane), lambda i: (i, 0)),
        compiler_params=pltpu.CompilerParams(
            dimension_semantics=("parallel",),      # megacore split on v7x
        ),
    )(xt, w1, b1, w2, b2)

    # Free reshape back to flat batch order; slice only when padding was added.
    out = out.reshape(n_pad)
    if n_pad != n:
        out = out[:n]
    return out.reshape(n, OUT_F)


def reference_mlp(x, w1, b1, w2, b2):
    h = jnp.maximum(x @ w1 + b1, 0.0)
    return jax.nn.sigmoid(h @ w2 + b2)


if __name__ == "__main__":
    key = jax.random.PRNGKey(0)
    k_x, k_w1, k_b1, k_w2, k_b2 = jax.random.split(key, 5)

    batch = 8

    # Deterministic init (mimics nn.Linear uniform(-1/sqrt(fan_in), ...)).
    x = jax.random.normal(k_x, (batch, IN_F), dtype=jnp.float32)
    lim1 = 1.0 / jnp.sqrt(IN_F)
    w1 = jax.random.uniform(k_w1, (IN_F, HID_F), minval=-lim1, maxval=lim1,
                            dtype=jnp.float32)
    b1 = jax.random.uniform(k_b1, (HID_F,), minval=-lim1, maxval=lim1,
                            dtype=jnp.float32)
    lim2 = 1.0 / jnp.sqrt(HID_F)
    w2 = jax.random.uniform(k_w2, (HID_F, OUT_F), minval=-lim2, maxval=lim2,
                            dtype=jnp.float32)
    b2 = jax.random.uniform(k_b2, (OUT_F,), minval=-lim2, maxval=lim2,
                            dtype=jnp.float32)

    out = fusion_mlp(x, w1, b1, w2, b2)
    out = jax.block_until_ready(out)

    ref = reference_mlp(x, w1, b1.reshape(1, HID_F), w2, b2.reshape(1, OUT_F))
    assert out.shape == (batch, OUT_F)
    # Tolerance loosened slightly for the approx-reciprocal sigmoid (~2^-12 rel).
    assert jnp.allclose(out, ref, atol=2e-3, rtol=1e-3)

    print("KERNEL_OK")
</pallas_src>

<mosaic_0001>
module attributes {stable_mosaic.version = 11 : i64} {
  func.func @fusion_mlp_kernel(%arg0: i32, %arg1: memref<2x8x128xf32, #tpu.memory_space<vmem>>, %arg2: memref<2x4xf32, #tpu.memory_space<smem>>, %arg3: memref<1x4xf32, #tpu.memory_space<smem>>, %arg4: memref<4x1xf32, #tpu.memory_space<smem>>, %arg5: memref<1x1xf32, #tpu.memory_space<smem>>, %arg6: memref<8x128xf32, #tpu.memory_space<vmem>>) attributes {dimension_semantics = [#tpu.dimension_semantics<parallel>], iteration_bounds = array<i64: 1>, scalar_prefetch = 0 : i64, scratch_operands = 0 : i64, tpu.core_type = #tpu.core_type<tc>, window_params = [{transform_indices = @transform_0, window_bounds = array<i64: 2, 8, 128>}, {transform_indices = @transform_1, window_bounds = array<i64: 2, 4>}, {transform_indices = @transform_2, window_bounds = array<i64: 1, 4>}, {transform_indices = @transform_3, window_bounds = array<i64: 4, 1>}, {transform_indices = @transform_4, window_bounds = array<i64: 1, 1>}, {transform_indices = @transform_5, window_bounds = array<i64: 8, 128>}]} {
    %c0 = arith.constant 0 : index
    %c0_0 = arith.constant 0 : index
    %c0_1 = arith.constant 0 : index
    %0 = vector.load %arg1[%c0, %c0_0, %c0_1] : memref<2x8x128xf32, #tpu.memory_space<vmem>>, vector<1x8x128xf32>
    %1 = vector.shape_cast %0 : vector<1x8x128xf32> to vector<8x128xf32>
    %c1 = arith.constant 1 : index
    %c0_2 = arith.constant 0 : index
    %c0_3 = arith.constant 0 : index
    %2 = vector.load %arg1[%c1, %c0_2, %c0_3] : memref<2x8x128xf32, #tpu.memory_space<vmem>>, vector<1x8x128xf32>
    %3 = vector.shape_cast %2 : vector<1x8x128xf32> to vector<8x128xf32>
    %cst = arith.constant 0.000000e+00 : f32
    %4 = vector.broadcast %cst : f32 to vector<8x128xf32>
    %c0_4 = arith.constant 0 : index
    %c0_5 = arith.constant 0 : index
    %5 = memref.load %arg5[%c0_4, %c0_5] : memref<1x1xf32, #tpu.memory_space<smem>>
    %6 = vector.broadcast %5 : f32 to vector<8x128xf32>
    %7 = arith.addf %4, %6 : vector<8x128xf32>
    %c0_6 = arith.constant 0 : index
    %c0_7 = arith.constant 0 : index
    %8 = memref.load %arg2[%c0_6, %c0_7] : memref<2x4xf32, #tpu.memory_space<smem>>
    %9 = vector.broadcast %8 : f32 to vector<8x128xf32>
    %10 = arith.mulf %9, %1 : vector<8x128xf32>
    %c1_8 = arith.constant 1 : index
    %c0_9 = arith.constant 0 : index
    %11 = memref.load %arg2[%c1_8, %c0_9] : memref<2x4xf32, #tpu.memory_space<smem>>
    %12 = vector.broadcast %11 : f32 to vector<8x128xf32>
    %13 = arith.mulf %12, %3 : vector<8x128xf32>
    %14 = arith.addf %10, %13 : vector<8x128xf32>
    %c0_10 = arith.constant 0 : index
    %c0_11 = arith.constant 0 : index
    %15 = memref.load %arg3[%c0_10, %c0_11] : memref<1x4xf32, #tpu.memory_space<smem>>
    %16 = vector.broadcast %15 : f32 to vector<8x128xf32>
    %17 = arith.addf %14, %16 : vector<8x128xf32>
    %cst_12 = arith.constant 0.000000e+00 : f32
    %18 = vector.broadcast %cst_12 : f32 to vector<8x128xf32>
    %19 = arith.maximumf %17, %18 : vector<8x128xf32>
    %c0_13 = arith.constant 0 : index
    %c0_14 = arith.constant 0 : index
    %20 = memref.load %arg4[%c0_13, %c0_14] : memref<4x1xf32, #tpu.memory_space<smem>>
    %21 = vector.broadcast %20 : f32 to vector<8x128xf32>
    %22 = arith.mulf %21, %19 : vector<8x128xf32>
    %23 = arith.addf %7, %22 : vector<8x128xf32>
    %c0_15 = arith.constant 0 : index
    %c1_16 = arith.constant 1 : index
    %24 = memref.load %arg2[%c0_15, %c1_16] : memref<2x4xf32, #tpu.memory_space<smem>>
    %25 = vector.broadcast %24 : f32 to vector<8x128xf32>
    %26 = arith.mulf %25, %1 : vector<8x128xf32>
    %c1_17 = arith.constant 1 : index
    %c1_18 = arith.constant 1 : index
    %27 = memref.load %arg2[%c1_17, %c1_18] : memref<2x4xf32, #tpu.memory_space<smem>>
    %28 = vector.broadcast %27 : f32 to vector<8x128xf32>
    %29 = arith.mulf %28, %3 : vector<8x128xf32>
    %30 = arith.addf %26, %29 : vector<8x128xf32>
    %c0_19 = arith.constant 0 : index
    %c1_20 = arith.constant 1 : index
    %31 = memref.load %arg3[%c0_19, %c1_20] : memref<1x4xf32, #tpu.memory_space<smem>>
    %32 = vector.broadcast %31 : f32 to vector<8x128xf32>
    %33 = arith.addf %30, %32 : vector<8x128xf32>
    %cst_21 = arith.constant 0.000000e+00 : f32
    %34 = vector.broadcast %cst_21 : f32 to vector<8x128xf32>
    %35 = arith.maximumf %33, %34 : vector<8x128xf32>
    %c1_22 = arith.constant 1 : index
    %c0_23 = arith.constant 0 : index
    %36 = memref.load %arg4[%c1_22, %c0_23] : memref<4x1xf32, #tpu.memory_space<smem>>
    %37 = vector.broadcast %36 : f32 to vector<8x128xf32>
    %38 = arith.mulf %37, %35 : vector<8x128xf32>
    %39 = arith.addf %23, %38 : vector<8x128xf32>
    %c0_24 = arith.constant 0 : index
    %c2 = arith.constant 2 : index
    %40 = memref.load %arg2[%c0_24, %c2] : memref<2x4xf32, #tpu.memory_space<smem>>
    %41 = vector.broadcast %40 : f32 to vector<8x128xf32>
    %42 = arith.mulf %41, %1 : vector<8x128xf32>
    %c1_25 = arith.constant 1 : index
    %c2_26 = arith.constant 2 : index
    %43 = memref.load %arg2[%c1_25, %c2_26] : memref<2x4xf32, #tpu.memory_space<smem>>
    %44 = vector.broadcast %43 : f32 to vector<8x128xf32>
    %45 = arith.mulf %44, %3 : vector<8x128xf32>
    %46 = arith.addf %42, %45 : vector<8x128xf32>
    %c0_27 = arith.constant 0 : index
    %c2_28 = arith.constant 2 : index
    %47 = memref.load %arg3[%c0_27, %c2_28] : memref<1x4xf32, #tpu.memory_space<smem>>
    %48 = vector.broadcast %47 : f32 to vector<8x128xf32>
    %49 = arith.addf %46, %48 : vector<8x128xf32>
    %cst_29 = arith.constant 0.000000e+00 : f32
    %50 = vector.broadcast %cst_29 : f32 to vector<8x128xf32>
    %51 = arith.maximumf %49, %50 : vector<8x128xf32>
    %c2_30 = arith.constant 2 : index
    %c0_31 = arith.constant 0 : index
    %52 = memref.load %arg4[%c2_30, %c0_31] : memref<4x1xf32, #tpu.memory_space<smem>>
    %53 = vector.broadcast %52 : f32 to vector<8x128xf32>
    %54 = arith.mulf %53, %51 : vector<8x128xf32>
    %55 = arith.addf %39, %54 : vector<8x128xf32>
    %c0_32 = arith.constant 0 : index
    %c3 = arith.constant 3 : index
    %56 = memref.load %arg2[%c0_32, %c3] : memref<2x4xf32, #tpu.memory_space<smem>>
    %57 = vector.broadcast %56 : f32 to vector<8x128xf32>
    %58 = arith.mulf %57, %1 : vector<8x128xf32>
    %c1_33 = arith.constant 1 : index
    %c3_34 = arith.constant 3 : index
    %59 = memref.load %arg2[%c1_33, %c3_34] : memref<2x4xf32, #tpu.memory_space<smem>>
    %60 = vector.broadcast %59 : f32 to vector<8x128xf32>
    %61 = arith.mulf %60, %3 : vector<8x128xf32>
    %62 = arith.addf %58, %61 : vector<8x128xf32>
    %c0_35 = arith.constant 0 : index
    %c3_36 = arith.constant 3 : index
    %63 = memref.load %arg3[%c0_35, %c3_36] : memref<1x4xf32, #tpu.memory_space<smem>>
    %64 = vector.broadcast %63 : f32 to vector<8x128xf32>
    %65 = arith.addf %62, %64 : vector<8x128xf32>
    %cst_37 = arith.constant 0.000000e+00 : f32
    %66 = vector.broadcast %cst_37 : f32 to vector<8x128xf32>
    %67 = arith.maximumf %65, %66 : vector<8x128xf32>
    %c3_38 = arith.constant 3 : index
    %c0_39 = arith.constant 0 : index
    %68 = memref.load %arg4[%c3_38, %c0_39] : memref<4x1xf32, #tpu.memory_space<smem>>
    %69 = vector.broadcast %68 : f32 to vector<8x128xf32>
    %70 = arith.mulf %69, %67 : vector<8x128xf32>
    %71 = arith.addf %55, %70 : vector<8x128xf32>
    %cst_40 = arith.constant 0.000000e+00 : f32
    %72 = vector.broadcast %cst_40 : f32 to vector<8x128xf32>
    %73 = arith.subf %72, %71 : vector<8x128xf32>
    %74 = math.exp %73 : vector<8x128xf32>
    %cst_41 = arith.constant 1.000000e+00 : f32
    %75 = vector.broadcast %cst_41 : f32 to vector<8x128xf32>
    %76 = arith.addf %75, %74 : vector<8x128xf32>
    %77 = tpu.reciprocal %76 {approx = true} : vector<8x128xf32> -> vector<8x128xf32>
    %c0_42 = arith.constant 0 : index
    %c0_43 = arith.constant 0 : index
    %78 = vector.load %arg6[%c0_42, %c0_43] : memref<8x128xf32, #tpu.memory_space<vmem>>, vector<8x128xf32>
    tpu.vector_store %arg6[%c0_42, %c0_43], %77 {strides = array<i32>} : memref<8x128xf32, #tpu.memory_space<vmem>>, vector<8x128xf32>,
    return
  }
  func.func @transform_0(%arg0: i32) -> (i32, i32, i32) {
    %c0_i32 = arith.constant 0 : i32
    %c0_i32_0 = arith.constant 0 : i32
    %c0_i32_1 = arith.constant 0 : i32
    return %c0_i32, %arg0, %c0_i32_0 : i32, i32, i32
  }
  func.func @transform_1(%arg0: i32) -> (i32, i32) {
    %c0_i32 = arith.constant 0 : i32
    %c0_i32_0 = arith.constant 0 : i32
    %c0_i32_1 = arith.constant 0 : i32
    return %c0_i32, %c0_i32_0 : i32, i32
  }
  func.func @transform_2(%arg0: i32) -> (i32, i32) {
    %c0_i32 = arith.constant 0 : i32
    %c0_i32_0 = arith.constant 0 : i32
    %c0_i32_1 = arith.constant 0 : i32
    return %c0_i32, %c0_i32_0 : i32, i32
  }
  func.func @transform_3(%arg0: i32) -> (i32, i32) {
    %c0_i32 = arith.constant 0 : i32
    %c0_i32_0 = arith.constant 0 : i32
    %c0_i32_1 = arith.constant 0 : i32
    return %c0_i32, %c0_i32_0 : i32, i32
  }
  func.func @transform_4(%arg0: i32) -> (i32, i32) {
    %c0_i32 = arith.constant 0 : i32
    %c0_i32_0 = arith.constant 0 : i32
    %c0_i32_1 = arith.constant 0 : i32
    return %c0_i32, %c0_i32_0 : i32, i32
  }
  func.func @transform_5(%arg0: i32) -> (i32, i32) {
    %c0_i32 = arith.constant 0 : i32
    %c0_i32_0 = arith.constant 0 : i32
    return %arg0, %c0_i32 : i32, i32
  }
}

</mosaic_0001>

<llo_original>
// kernel: tpu_custom_call.1
$region0: #{tpu_custom_call.1}
  #allocation0 [shape = 'u32[]', space=smem, size = 0x4, offset = 0x4, fixed_abs, tag = 'smem constant byte address 0x4 - core index']
  #allocation1 [shape = 'u32[144,128]{1,0:T(1,128)}', space=vmem, size = 0x12000, scoped, tag = 'internal scratch']
  #allocation2 [shape = 'f32[1,1]{1,0:T(1,128)S(6)}', space=smem, size = 0x200, scoped, tag = 'scoped memory for tpu_custom_call.1']
  %s0 = inlined_call_operand.hbm [shape: f32[2,8,128], index: 0, kind: input, shape index: {}]
  %s1 = inlined_call_operand.vmem [shape: f32[2,4], index: 1, kind: input, shape index: {}]
  %s2 = inlined_call_operand.vmem [shape: f32[1,4], index: 2, kind: input, shape index: {}]
  %s3 = inlined_call_operand.vmem [shape: f32[4,1], index: 3, kind: input, shape index: {}]
  %s4 = inlined_call_operand.<no memory space> [shape: f32[1,1], index: 4, kind: input, shape index: {}]
  %s5 = inlined_call_operand.hbm [shape: f32[8,128], index: 5, kind: output, shape index: {}]
  %s6 = sld [smem:[#allocation0]]
  $region46: #{tpu_custom_call.1} parent=0
    _
  %s8 = ssub.s32 1, %s6
  %s9 = scalar_select 0, %s8, %s6
  %10 = sst [smem:[#allocation2]] %s4
  $region1: #{tpu_custom_call.1} parent=0
    #allocation3 [shape = 'u8[8192]{0}', space=vmem, size = 0x2000, scoped, tag = 'input window, operand 0, single buffered']
    #allocation4 [shape = 's32[1]{0}', space=sflag, size = 0x4, scoped, tag = 'scoped memory for tpu_custom_call.1']
    #allocation5 [shape = 's32[1]{0}', space=sflag, size = 0x4, scoped, tag = 'scoped memory for tpu_custom_call.1']
    #allocation6 [shape = 's32[1]{0}', space=sflag, size = 0x4, scoped, tag = 'scoped memory for tpu_custom_call.1']
    #allocation7 [shape = 'u8[1024]{0}', space=smem, size = 0x400, scoped, tag = 'input window, operand 1, single buffered']
    #allocation8 [shape = 'u8[512]{0}', space=smem, size = 0x200, scoped, tag = 'input window, operand 2, single buffered']
    #allocation9 [shape = 's32[1]{0}', space=sflag, size = 0x4, scoped, tag = 'scoped memory for tpu_custom_call.1']
    #allocation10 [shape = 'u8[2048]{0}', space=smem, size = 0x800, scoped, tag = 'input window, operand 3, single buffered']
    #allocation11 [shape = 'u8[4096]{0}', space=vmem, size = 0x1000, scoped, tag = 'output window, operand 0, single buffered']
    %11 = vsyncpa [#allocation4], 0
    %12 = vsyncpa [#allocation6], 0
    %13 = vsyncpa [#allocation9], 0
    %14 = vsyncpa [#allocation5], 0
    // Predicated region
    $region2: #{tpu_custom_call.1} parent=1 // pred_check
      _
    $region3: #{tpu_custom_call.1} parent=1 // pred_check_branch
      %16 = sbr.rel (0) target = $region5
    $region4: #{tpu_custom_call.1} parent=1 // pred_region
      %s18 = ssub.s32 256, 256
      %19 = vsyncadd [#allocation4], %s18
      %s20 = sshll.u32 [#allocation3], 4
      %s21 = int_to_ptr.vmem [resolvable:$true] %s20
      %26 = dma.hbm_to_vmem [thread:$0]  %s0, 256, %s21, [#allocation4], 128, 128, 8
    $region5: #{tpu_custom_call.1} parent=1 // pred_fallthru
      _
    // Predicated region
    $region6: #{tpu_custom_call.1} parent=1 // pred_check
      _
    $region7: #{tpu_custom_call.1} parent=1 // pred_check_branch
      %28 = sbr.rel (0) target = $region9
    $region8: #{tpu_custom_call.1} parent=1 // pred_region
      %s30 = ssub.s32 32, 32
      %31 = vsyncadd [#allocation6], %s30
      %s33 = sshll.u32 %s1, 4
      %s34 = int_to_ptr.vmem [resolvable:$true] %s33
      %36 = dma.vmem_to_smem %s34, 32, [#allocation7], [#allocation6]
    $region9: #{tpu_custom_call.1} parent=1 // pred_fallthru
      _
    // Predicated region
    $region10: #{tpu_custom_call.1} parent=1 // pred_check
      _
    $region11: #{tpu_custom_call.1} parent=1 // pred_check_branch
      %38 = sbr.rel (0) target = $region13
    $region12: #{tpu_custom_call.1} parent=1 // pred_region
      %s40 = ssub.s32 16, 16
      %41 = vsyncadd [#allocation9], %s40
      %s43 = sshll.u32 %s2, 4
      %s44 = int_to_ptr.vmem [resolvable:$true] %s43
      %46 = dma.vmem_to_smem %s44, 16, [#allocation8], [#allocation9]
    $region13: #{tpu_custom_call.1} parent=1 // pred_fallthru
      _
    // Predicated region
    $region14: #{tpu_custom_call.1} parent=1 // pred_check
      _
    $region15: #{tpu_custom_call.1} parent=1 // pred_check_branch
      %48 = sbr.rel (0) target = $region17
    $region16: #{tpu_custom_call.1} parent=1 // pred_region
      %s50 = ssub.s32 64, 64
      %51 = vsyncadd [#allocation9], %s50
      %s53 = sshll.u32 %s3, 4
      %s54 = int_to_ptr.vmem [resolvable:$true] %s53
      %56 = dma.vmem_to_smem %s54, 64, [#allocation10], [#allocation9]
    $region17: #{tpu_custom_call.1} parent=1 // pred_fallthru
      _
    // Predicated region
    $region18: #{tpu_custom_call.1} parent=1 // pred_check
      _
    $region19: #{tpu_custom_call.1} parent=1 // pred_check_branch
      %58 = sbr.rel (0) target = $region21
    $region20: #{tpu_custom_call.1} parent=1 // pred_region
      _
    $region21: #{tpu_custom_call.1} parent=1 // pred_fallthru
      _
    // Predicated region
    $region22: #{tpu_custom_call.1} parent=1 // pred_check
      _
    $region23: #{tpu_custom_call.1} parent=1 // pred_check_branch
      %60 = sbr.rel (0) target = $region25
    $region24: #{tpu_custom_call.1} parent=1 // pred_region
      %61 = dma.done [#allocation4], 256
    $region25: #{tpu_custom_call.1} parent=1 // pred_fallthru
      _
    // Predicated region
    $region26: #{tpu_custom_call.1} parent=1 // pred_check
      _
    $region27: #{tpu_custom_call.1} parent=1 // pred_check_branch
      %63 = sbr.rel (0) target = $region29
    $region28: #{tpu_custom_call.1} parent=1 // pred_region
      %64 = dma.done [#allocation6], 32
    $region29: #{tpu_custom_call.1} parent=1 // pred_fallthru
      _
    // Predicated region
    $region30: #{tpu_custom_call.1} parent=1 // pred_check
      _
    $region31: #{tpu_custom_call.1} parent=1 // pred_check_branch
      %66 = sbr.rel (0) target = $region33
    $region32: #{tpu_custom_call.1} parent=1 // pred_region
      %67 = dma.done [#allocation9], 16
    $region33: #{tpu_custom_call.1} parent=1 // pred_fallthru
      _
    // Predicated region
    $region34: #{tpu_custom_call.1} parent=1 // pred_check
      _
    $region35: #{tpu_custom_call.1} parent=1 // pred_check_branch
      %69 = sbr.rel (0) target = $region37
    $region36: #{tpu_custom_call.1} parent=1 // pred_region
      %70 = dma.done [#allocation9], 64
    $region37: #{tpu_custom_call.1} parent=1 // pred_fallthru
      _
    %71 = sfence
    %v72 = vld [vmem:[#allocation3] sm:$0xff]
    %s73 = scalar_lea.vmem [#allocation3], 8
    %v74 = vld [vmem:[%s73] sm:$0xff]
    %s75 = sld [smem:[#allocation2]]
    %v76 = vstv %s75
    %v77 = vadd.f32 %v76, 0.0
    %s78 = sld [smem:[#allocation7]]
    %v79 = vstv %s78
    %v80 = vmul.f32 %v79, %v72
    %s81 = sld [smem:[#allocation7 + $0x80]]
    %v82 = vstv %s81
    %v83 = vmul.f32 %v82, %v74
    %v84 = vadd.f32 %v80, %v83
    %s85 = sld [smem:[#allocation8]]
    %v86 = vstv %s85
    %v87 = vadd.f32 %v84, %v86
    %v88 = vmax.f32 %v87, 0.0
    %s89 = sld [smem:[#allocation10]]
    %v90 = vstv %s89
    %v91 = vmul.f32 %v90, %v88
    %v92 = vadd.f32 %v77, %v91
    %s93 = sld [smem:[#allocation7 + $0x1]]
    %v94 = vstv %s93
    %v95 = vmul.f32 %v94, %v72
    %s96 = sld [smem:[#allocation7 + $0x81]]
    %v97 = vstv %s96
    %v98 = vmul.f32 %v97, %v74
    %v99 = vadd.f32 %v95, %v98
    %s100 = sld [smem:[#allocation8 + $0x1]]
    %v101 = vstv %s100
    %v102 = vadd.f32 %v99, %v101
    %v103 = vmax.f32 %v102, 0.0
    %s104 = sld [smem:[#allocation10 + $0x80]]
    %v105 = vstv %s104
    %v106 = vmul.f32 %v105, %v103
    %v107 = vadd.f32 %v92, %v106
    %s108 = sld [smem:[#allocation7 + $0x2]]
    %v109 = vstv %s108
    %v110 = vmul.f32 %v109, %v72
    %s111 = sld [smem:[#allocation7 + $0x82]]
    %v112 = vstv %s111
    %v113 = vmul.f32 %v112, %v74
    %v114 = vadd.f32 %v110, %v113
    %s115 = sld [smem:[#allocation8 + $0x2]]
    %v116 = vstv %s115
    %v117 = vadd.f32 %v114, %v116
    %v118 = vmax.f32 %v117, 0.0
    %s119 = sld [smem:[#allocation10 + $0x100]]
    %v120 = vstv %s119
    %v121 = vmul.f32 %v120, %v118
    %v122 = vadd.f32 %v107, %v121
    %s123 = sld [smem:[#allocation7 + $0x3]]
    %v124 = vstv %s123
    %v125 = vmul.f32 %v124, %v72
    %s126 = sld [smem:[#allocation7 + $0x83]]
    %v127 = vstv %s126
    %v128 = vmul.f32 %v127, %v74
    %v129 = vadd.f32 %v125, %v128
    %s130 = sld [smem:[#allocation8 + $0x3]]
    %v131 = vstv %s130
    %v132 = vadd.f32 %v129, %v131
    %v133 = vmax.f32 %v132, 0.0
    %s134 = sld [smem:[#allocation10 + $0x180]]
    %v135 = vstv %s134
    %v136 = vmul.f32 %v135, %v133
    %v137 = vadd.f32 %v122, %v136
    %v138 = vsub.f32 0.0, %v137
    %v139 = vmul.f32 %v138, 1.442695
    %v140 = vpow.pop %v139
    %v141 = vadd.f32 %v140, 1.0
    %v142 = vrcp.pop %v141
    %143 = vst [vmem:[#allocation11] sm:$0xff] %v142
    // Predicated region
    $region38: #{tpu_custom_call.1} parent=1 // pred_check
      _
    $region39: #{tpu_custom_call.1} parent=1 // pred_check_branch
      %145 = sbr.rel (0) target = $region41
    $region40: #{tpu_custom_call.1} parent=1 // pred_region
      %s147 = ssub.s32 128, 128
      %148 = vsyncadd [#allocation5], %s147
      %s150 = sshll.u32 [#allocation11], 4
      %s151 = int_to_ptr.vmem [resolvable:$true] %s150
      %153 = dma.vmem_to_hbm [thread:$0]  %s151, 128, %s5, [#allocation5]
    $region41: #{tpu_custom_call.1} parent=1 // pred_fallthru
      _
    // Predicated region
    $region42: #{tpu_custom_call.1} parent=1 // pred_check
      _
    $region43: #{tpu_custom_call.1} parent=1 // pred_check_branch
      %155 = sbr.rel (0) target = $region45
    $region44: #{tpu_custom_call.1} parent=1 // pred_region
      %156 = dma.done [#allocation5], 128
    $region45: #{tpu_custom_call.1} parent=1 // pred_fallthru
      _
    %157 = vsyncpa [#allocation4], 1
    %158 = vsyncpa [#allocation5], 1
    %159 = vsyncpa [#allocation6], 1
    %160 = vsyncpa [#allocation9], 1

</llo_original>
